<compile_context>
chip_gen: v5e
topology: v5e:2x2
jax: 0.10.0
libtpu: 0.0.40
codegen_flags: <defaults>
</compile_context>

<pallas_src>
import functools
import math

import jax
import jax.numpy as jnp
from jax.experimental import pallas as pl
from jax.experimental.pallas import tpu as pltpu


_LANES = 128
_SUBLANES = 8


def _loss_kernel(inv_3n, inv_n, inv_nts, inv_nps,
                 lam_ref, c_ref, f_ref, t_ref, beta_ref, ts_ref, ps_ref,
                 out_ref):
    lam = lam_ref[0, 0]

    c = c_ref[...]        # (3, N_rays)  coarse rgb, rays on the lane axis
    f = f_ref[...]        # (3, N_rays)  fine rgb
    t = t_ref[...]        # (3, N_rays)  targets
    beta = beta_ref[...]  # (1, N_rays)

    d_c = c - t
    d_f = f - t

    # Reduce the 3 rgb channels (sublane axis) first -> per-ray row sums.
    sq_c = jnp.sum(d_c * d_c, axis=0, keepdims=True)    # (1, N_rays)
    sq_f = jnp.sum(d_f * d_f, axis=0, keepdims=True)    # (1, N_rays)

    # c_l = 0.5 * mean((rgb_coarse - targets)^2)
    c_l = 0.5 * inv_3n * jnp.sum(sq_c)

    # f_l = mean((rgb_fine - targets)^2 / (2 * beta^2)); one reciprocal per ray
    inv_2b2 = pl.reciprocal(2.0 * beta * beta, approx=False)   # (1, N_rays)
    f_l = inv_3n * jnp.sum(sq_f * inv_2b2)

    # b_l = mean(log(beta))
    b_l = inv_n * jnp.sum(jnp.log(beta))

    # s_l = lambda_u * (mean(transient_sigmas) + mean(person_sigmas)).
    # Slabs are zero-padded -> sum / true_count.  Per-lane partial sums are
    # combined first so only one final cross-lane reduce is needed.
    ts_part = jnp.sum(ts_ref[...], axis=0, keepdims=True) * inv_nts  # (1, 128)
    ps_part = jnp.sum(ps_ref[...], axis=0, keepdims=True) * inv_nps  # (1, 128)
    s_l = lam * jnp.sum(ts_part + ps_part)

    # Single unmasked (8, 128) store; rows 0..3 carry the four scalars.
    row = jax.lax.broadcasted_iota(jnp.int32, out_ref.shape, 0)
    out_ref[...] = jnp.where(row == 0, c_l,
                   jnp.where(row == 1, f_l,
                   jnp.where(row == 2, b_l,
                   jnp.where(row == 3, s_l, 0.0))))


def _to_lane_slab(x):
    """Flatten and zero-pad to a lane/sublane-aligned (8k, 128) f32 slab."""
    x = jnp.asarray(x, jnp.float32).reshape(-1)
    n = x.shape[0]
    rows = max(1, math.ceil(n / _LANES))
    rows = math.ceil(rows / _SUBLANES) * _SUBLANES
    pad = rows * _LANES - n
    if pad:
        x = jnp.pad(x, (0, pad))
    return x.reshape(rows, _LANES), n


def nerfw_loss(inputs, targets, lambda_u=0.01):
    """Pallas equivalent of Loss.forward (with 'rgb_fine' present)."""
    c = jnp.asarray(inputs['rgb_coarse'], jnp.float32).T            # (3, N)
    f = jnp.asarray(inputs['rgb_fine'], jnp.float32).T              # (3, N)
    t = jnp.asarray(targets, jnp.float32).T                         # (3, N)
    beta = jnp.asarray(inputs['beta'], jnp.float32).reshape(1, -1)  # (1, N)

    ts_slab, n_ts = _to_lane_slab(inputs['transient_sigmas'])
    ps_slab, n_ps = _to_lane_slab(inputs['person_sigmas'])

    n_rays = c.shape[1]
    lam = jnp.full((1, 1), lambda_u, jnp.float32)

    kernel = functools.partial(
        _loss_kernel,
        1.0 / (3.0 * n_rays),   # inv_3n  (shape-derived, static)
        1.0 / n_rays,           # inv_n
        1.0 / n_ts,             # inv_nts (true count, corrects zero padding)
        1.0 / n_ps,             # inv_nps
    )

    out = pl.pallas_call(
        kernel,
        out_shape=jax.ShapeDtypeStruct((_SUBLANES, _LANES), jnp.float32),
        in_specs=[pl.BlockSpec(memory_space=pltpu.MemorySpace.SMEM)]
                 + [pl.BlockSpec(memory_space=pltpu.MemorySpace.VMEM)] * 6,
        out_specs=pl.BlockSpec(memory_space=pltpu.MemorySpace.VMEM),
    )(lam, c, f, t, beta, ts_slab, ps_slab)

    return {
        'c_l': out[0, 0],
        'f_l': out[1, 0],
        'b_l': out[2, 0],
        's_l': out[3, 0],
    }


def _reference_loss(inputs, targets, lambda_u=0.01):
    """Pure-JAX reference mirroring the PyTorch module."""
    ret = {}
    ret['c_l'] = 0.5 * jnp.mean((inputs['rgb_coarse'] - targets) ** 2)
    ret['f_l'] = jnp.mean(
        (inputs['rgb_fine'] - targets) ** 2 / (2.0 * inputs['beta'][:, None] ** 2)
    )
    ret['b_l'] = jnp.mean(jnp.log(inputs['beta']))
    ret['s_l'] = lambda_u * jnp.mean(inputs['transient_sigmas']) + \
                 lambda_u * jnp.mean(inputs['person_sigmas'])
    return ret


if __name__ == "__main__":
    key = jax.random.PRNGKey(0)
    k1, k2, k3, k4, k5, k6 = jax.random.split(key, 6)

    n_rays = 8
    n_samples = 16

    inputs = {
        'rgb_coarse': jax.random.uniform(k1, (n_rays, 3), jnp.float32),
        'rgb_fine': jax.random.uniform(k2, (n_rays, 3), jnp.float32),
        # beta must be positive (produced by softplus + min_beta in NeRF-W)
        'beta': jax.random.uniform(k3, (n_rays,), jnp.float32, minval=0.1, maxval=1.0),
        'transient_sigmas': jnp.abs(jax.random.normal(k4, (n_rays * n_samples,), jnp.float32)),
        'person_sigmas': jnp.abs(jax.random.normal(k5, (n_rays * n_samples,), jnp.float32)),
    }
    targets = jax.random.uniform(k6, (n_rays, 3), jnp.float32)

    out = nerfw_loss(inputs, targets, lambda_u=0.01)
    out = jax.block_until_ready(out)

    ref = _reference_loss(inputs, targets, lambda_u=0.01)
    for k in ('c_l', 'f_l', 'b_l', 's_l'):
        assert jnp.allclose(out[k], ref[k], rtol=1e-5, atol=1e-6), (k, out[k], ref[k])

    print("KERNEL_OK")
</pallas_src>

<mosaic_0001>
module attributes {stable_mosaic.version = 11 : i64} {
  func.func @_loss_kernel(%arg0: memref<1x1xf32, #tpu.memory_space<smem>>, %arg1: memref<3x8xf32, #tpu.memory_space<vmem>>, %arg2: memref<3x8xf32, #tpu.memory_space<vmem>>, %arg3: memref<3x8xf32, #tpu.memory_space<vmem>>, %arg4: memref<1x8xf32, #tpu.memory_space<vmem>>, %arg5: memref<8x128xf32, #tpu.memory_space<vmem>>, %arg6: memref<8x128xf32, #tpu.memory_space<vmem>>, %arg7: memref<8x128xf32, #tpu.memory_space<vmem>>) attributes {dimension_semantics = [], scalar_prefetch = 0 : i64, scratch_operands = 0 : i64, tpu.core_type = #tpu.core_type<tc>} {
    %c0 = arith.constant 0 : index
    %c0_0 = arith.constant 0 : index
    %0 = memref.load %arg0[%c0, %c0_0] : memref<1x1xf32, #tpu.memory_space<smem>>
    %c0_1 = arith.constant 0 : index
    %c0_2 = arith.constant 0 : index
    %1 = vector.load %arg1[%c0_1, %c0_2] : memref<3x8xf32, #tpu.memory_space<vmem>>, vector<3x8xf32>
    %c0_3 = arith.constant 0 : index
    %c0_4 = arith.constant 0 : index
    %2 = vector.load %arg2[%c0_3, %c0_4] : memref<3x8xf32, #tpu.memory_space<vmem>>, vector<3x8xf32>
    %c0_5 = arith.constant 0 : index
    %c0_6 = arith.constant 0 : index
    %3 = vector.load %arg3[%c0_5, %c0_6] : memref<3x8xf32, #tpu.memory_space<vmem>>, vector<3x8xf32>
    %c0_7 = arith.constant 0 : index
    %c0_8 = arith.constant 0 : index
    %4 = vector.load %arg4[%c0_7, %c0_8] : memref<1x8xf32, #tpu.memory_space<vmem>>, vector<1x8xf32>
    %5 = arith.subf %1, %3 : vector<3x8xf32>
    %6 = arith.subf %2, %3 : vector<3x8xf32>
    %7 = arith.mulf %5, %5 : vector<3x8xf32>
    %cst = arith.constant dense<0.000000e+00> : vector<8xf32>
    %8 = vector.multi_reduction <add>, %7, %cst [0] : vector<3x8xf32> to vector<8xf32>
    %9 = vector.shape_cast %8 : vector<8xf32> to vector<1x8xf32>
    %10 = arith.mulf %6, %6 : vector<3x8xf32>
    %cst_9 = arith.constant dense<0.000000e+00> : vector<8xf32>
    %11 = vector.multi_reduction <add>, %10, %cst_9 [0] : vector<3x8xf32> to vector<8xf32>
    %12 = vector.shape_cast %11 : vector<8xf32> to vector<1x8xf32>
    %13 = vector.shape_cast %9 : vector<1x8xf32> to vector<1x1x8xf32>
    %cst_10 = arith.constant dense<0.000000e+00> : vector<1xf32>
    %14 = vector.multi_reduction <add>, %13, %cst_10 [1, 2] : vector<1x1x8xf32> to vector<1xf32>
    %15 = vector.shape_cast %14 : vector<1xf32> to vector<1x1x1xf32>
    %16 = vector.extract %15[0, 0, 0] : f32 from vector<1x1x1xf32>
    %cst_11 = arith.constant 0.020833334 : f32
    %17 = arith.mulf %cst_11, %16 : f32
    %cst_12 = arith.constant 2.000000e+00 : f32
    %18 = vector.broadcast %cst_12 : f32 to vector<1x8xf32>
    %19 = arith.mulf %18, %4 : vector<1x8xf32>
    %20 = arith.mulf %19, %4 : vector<1x8xf32>
    %21 = tpu.reciprocal %20 : vector<1x8xf32> -> vector<1x8xf32>
    %22 = arith.mulf %12, %21 : vector<1x8xf32>
    %23 = vector.shape_cast %22 : vector<1x8xf32> to vector<1x1x8xf32>
    %cst_13 = arith.constant dense<0.000000e+00> : vector<1xf32>
    %24 = vector.multi_reduction <add>, %23, %cst_13 [1, 2] : vector<1x1x8xf32> to vector<1xf32>
    %25 = vector.shape_cast %24 : vector<1xf32> to vector<1x1x1xf32>
    %26 = vector.extract %25[0, 0, 0] : f32 from vector<1x1x1xf32>
    %cst_14 = arith.constant 0.0416666679 : f32
    %27 = arith.mulf %cst_14, %26 : f32
    %28 = math.log %4 : vector<1x8xf32>
    %29 = vector.shape_cast %28 : vector<1x8xf32> to vector<1x1x8xf32>
    %cst_15 = arith.constant dense<0.000000e+00> : vector<1xf32>
    %30 = vector.multi_reduction <add>, %29, %cst_15 [1, 2] : vector<1x1x8xf32> to vector<1xf32>
    %31 = vector.shape_cast %30 : vector<1xf32> to vector<1x1x1xf32>
    %32 = vector.extract %31[0, 0, 0] : f32 from vector<1x1x1xf32>
    %cst_16 = arith.constant 1.250000e-01 : f32
    %33 = arith.mulf %cst_16, %32 : f32
    %c0_17 = arith.constant 0 : index
    %c0_18 = arith.constant 0 : index
    %34 = vector.load %arg5[%c0_17, %c0_18] : memref<8x128xf32, #tpu.memory_space<vmem>>, vector<8x128xf32>
    %cst_19 = arith.constant dense<0.000000e+00> : vector<128xf32>
    %35 = vector.multi_reduction <add>, %34, %cst_19 [0] : vector<8x128xf32> to vector<128xf32>
    %36 = vector.shape_cast %35 : vector<128xf32> to vector<1x128xf32>
    %cst_20 = arith.constant 7.812500e-03 : f32
    %37 = vector.broadcast %cst_20 : f32 to vector<1x128xf32>
    %38 = arith.mulf %36, %37 : vector<1x128xf32>
    %c0_21 = arith.constant 0 : index
    %c0_22 = arith.constant 0 : index
    %39 = vector.load %arg6[%c0_21, %c0_22] : memref<8x128xf32, #tpu.memory_space<vmem>>, vector<8x128xf32>
    %cst_23 = arith.constant dense<0.000000e+00> : vector<128xf32>
    %40 = vector.multi_reduction <add>, %39, %cst_23 [0] : vector<8x128xf32> to vector<128xf32>
    %41 = vector.shape_cast %40 : vector<128xf32> to vector<1x128xf32>
    %cst_24 = arith.constant 7.812500e-03 : f32
    %42 = vector.broadcast %cst_24 : f32 to vector<1x128xf32>
    %43 = arith.mulf %41, %42 : vector<1x128xf32>
    %44 = arith.addf %38, %43 : vector<1x128xf32>
    %45 = vector.shape_cast %44 : vector<1x128xf32> to vector<1x1x128xf32>
    %cst_25 = arith.constant dense<0.000000e+00> : vector<1xf32>
    %46 = vector.multi_reduction <add>, %45, %cst_25 [1, 2] : vector<1x1x128xf32> to vector<1xf32>
    %47 = vector.shape_cast %46 : vector<1xf32> to vector<1x1x1xf32>
    %48 = vector.extract %47[0, 0, 0] : f32 from vector<1x1x1xf32>
    %49 = arith.mulf %0, %48 : f32
    %50 = tpu.iota {dimensions = array<i32: 0>} : vector<8x128xi32>
    %c0_i32 = arith.constant 0 : i32
    %51 = vector.broadcast %c0_i32 : i32 to vector<8x128xi32>
    %52 = arith.cmpi eq, %50, %51 : vector<8x128xi32>
    %c1_i32 = arith.constant 1 : i32
    %53 = vector.broadcast %c1_i32 : i32 to vector<8x128xi32>
    %54 = arith.cmpi eq, %50, %53 : vector<8x128xi32>
    %c2_i32 = arith.constant 2 : i32
    %55 = vector.broadcast %c2_i32 : i32 to vector<8x128xi32>
    %56 = arith.cmpi eq, %50, %55 : vector<8x128xi32>
    %c3_i32 = arith.constant 3 : i32
    %57 = vector.broadcast %c3_i32 : i32 to vector<8x128xi32>
    %58 = arith.cmpi eq, %50, %57 : vector<8x128xi32>
    %cst_26 = arith.constant 0.000000e+00 : f32
    %59 = vector.broadcast %49 : f32 to vector<8x128xf32>
    %60 = vector.broadcast %cst_26 : f32 to vector<8x128xf32>
    %61 = arith.select %58, %59, %60 : vector<8x128xi1>, vector<8x128xf32>
    %62 = vector.broadcast %33 : f32 to vector<8x128xf32>
    %63 = arith.select %56, %62, %61 : vector<8x128xi1>, vector<8x128xf32>
    %64 = vector.broadcast %27 : f32 to vector<8x128xf32>
    %65 = arith.select %54, %64, %63 : vector<8x128xi1>, vector<8x128xf32>
    %66 = vector.broadcast %17 : f32 to vector<8x128xf32>
    %67 = arith.select %52, %66, %65 : vector<8x128xi1>, vector<8x128xf32>
    %c0_27 = arith.constant 0 : index
    %c0_28 = arith.constant 0 : index
    %68 = vector.load %arg7[%c0_27, %c0_28] : memref<8x128xf32, #tpu.memory_space<vmem>>, vector<8x128xf32>
    tpu.vector_store %arg7[%c0_27, %c0_28], %67 {strides = array<i32>} : memref<8x128xf32, #tpu.memory_space<vmem>>, vector<8x128xf32>,
    return
  }
}

</mosaic_0001>

<llo_original>
// kernel: tpu_custom_call.1
$region0: #{tpu_custom_call.1}
  #allocation0 [shape = 'u32[]', space=smem, size = 0x4, offset = 0x4, fixed_abs, tag = 'smem constant byte address 0x4 - core index']
  #allocation1 [shape = 'u32[72,128]{1,0:T(1,128)}', space=vmem, size = 0x9000, scoped, tag = 'internal scratch']
  #allocation2 [shape = 'f32[1,1]{1,0:T(1,128)S(6)}', space=smem, size = 0x200, scoped, tag = 'scoped memory for tpu_custom_call.1']
  %s0 = inlined_call_operand.<no memory space> [shape: f32[1,1], index: 0, kind: input, shape index: {}]
  %s1 = inlined_call_operand.hbm [shape: f32[3,8], index: 1, kind: input, shape index: {}]
  %s2 = inlined_call_operand.hbm [shape: f32[3,8], index: 2, kind: input, shape index: {}]
  %s3 = inlined_call_operand.hbm [shape: f32[3,8], index: 3, kind: input, shape index: {}]
  %s4 = inlined_call_operand.vmem [shape: f32[1,8], index: 4, kind: input, shape index: {}]
  %s5 = inlined_call_operand.hbm [shape: f32[8,128], index: 5, kind: input, shape index: {}]
  %s6 = inlined_call_operand.hbm [shape: f32[8,128], index: 6, kind: input, shape index: {}]
  %s7 = inlined_call_operand.hbm [shape: f32[8,128], index: 7, kind: output, shape index: {}]
  %s8 = sld [smem:[#allocation0]]
  $region58: #{tpu_custom_call.1} parent=0
    _
  %s10 = ssub.s32 1, %s8
  %s11 = scalar_select 0, %s10, %s8
  %12 = sst [smem:[#allocation2]] %s0
  $region1: #{tpu_custom_call.1} parent=0
    #allocation3 [shape = 'u8[2048]{0}', space=vmem, size = 0x800, scoped, tag = 'input window, operand 1, single buffered']
    #allocation4 [shape = 's32[1]{0}', space=sflag, size = 0x4, scoped, tag = 'scoped memory for tpu_custom_call.1']
    #allocation5 [shape = 's32[1]{0}', space=sflag, size = 0x4, scoped, tag = 'scoped memory for tpu_custom_call.1']
    #allocation6 [shape = 'u8[2048]{0}', space=vmem, size = 0x800, scoped, tag = 'input window, operand 2, single buffered']
    #allocation7 [shape = 's32[1]{0}', space=sflag, size = 0x4, scoped, tag = 'scoped memory for tpu_custom_call.1']
    #allocation8 [shape = 'u8[2048]{0}', space=vmem, size = 0x800, scoped, tag = 'input window, operand 3, single buffered']
    #allocation9 [shape = 'u8[4096]{0}', space=vmem, size = 0x1000, scoped, tag = 'input window, operand 5, single buffered']
    #allocation10 [shape = 's32[1]{0}', space=sflag, size = 0x4, scoped, tag = 'scoped memory for tpu_custom_call.1']
    #allocation11 [shape = 'u8[4096]{0}', space=vmem, size = 0x1000, scoped, tag = 'input window, operand 6, single buffered']
    #allocation12 [shape = 'u8[4096]{0}', space=vmem, size = 0x1000, scoped, tag = 'output window, operand 0, single buffered']
    %13 = vsyncpa [#allocation4], 0
    %14 = vsyncpa [#allocation7], 0
    %15 = vsyncpa [#allocation10], 0
    %16 = vsyncpa [#allocation5], 0
    // Predicated region
    $region2: #{tpu_custom_call.1} parent=1 // pred_check
      _
    $region3: #{tpu_custom_call.1} parent=1 // pred_check_branch
      %18 = sbr.rel (0) target = $region5
    $region4: #{tpu_custom_call.1} parent=1 // pred_region
      _
    $region5: #{tpu_custom_call.1} parent=1 // pred_fallthru
      _
    // Predicated region
    $region6: #{tpu_custom_call.1} parent=1 // pred_check
      _
    $region7: #{tpu_custom_call.1} parent=1 // pred_check_branch
      %20 = sbr.rel (0) target = $region9
    $region8: #{tpu_custom_call.1} parent=1 // pred_region
      %22 = vsyncadd [#allocation4], 0
      %s24 = sshll.u32 %s1, 4
      %s25 = int_to_ptr.hbm [resolvable:$true] %s24
      %s26 = sshll.u32 [#allocation3], 4
      %s27 = int_to_ptr.vmem [resolvable:$true] %s26
      %29 = dma.hbm_to_vmem [thread:$0]  %s25, 64, %s27, [#allocation4]
    $region9: #{tpu_custom_call.1} parent=1 // pred_fallthru
      _
    // Predicated region
    $region10: #{tpu_custom_call.1} parent=1 // pred_check
      _
    $region11: #{tpu_custom_call.1} parent=1 // pred_check_branch
      %31 = sbr.rel (0) target = $region13
    $region12: #{tpu_custom_call.1} parent=1 // pred_region
      %33 = vsyncadd [#allocation7], 0
      %s35 = sshll.u32 %s2, 4
      %s36 = int_to_ptr.hbm [resolvable:$true] %s35
      %s37 = sshll.u32 [#allocation6], 4
      %s38 = int_to_ptr.vmem [resolvable:$true] %s37
      %40 = dma.hbm_to_vmem [thread:$0]  %s36, 64, %s38, [#allocation7]
    $region13: #{tpu_custom_call.1} parent=1 // pred_fallthru
      _
    // Predicated region
    $region14: #{tpu_custom_call.1} parent=1 // pred_check
      _
    $region15: #{tpu_custom_call.1} parent=1 // pred_check_branch
      %42 = sbr.rel (0) target = $region17
    $region16: #{tpu_custom_call.1} parent=1 // pred_region
      %44 = vsyncadd [#allocation7], 0
      %s46 = sshll.u32 %s3, 4
      %s47 = int_to_ptr.hbm [resolvable:$true] %s46
      %s48 = sshll.u32 [#allocation8], 4
      %s49 = int_to_ptr.vmem [resolvable:$true] %s48
      %51 = dma.hbm_to_vmem [thread:$0]  %s47, 64, %s49, [#allocation7]
    $region17: #{tpu_custom_call.1} parent=1 // pred_fallthru
      _
    // Predicated region
    $region18: #{tpu_custom_call.1} parent=1 // pred_check
      _
    $region19: #{tpu_custom_call.1} parent=1 // pred_check_branch
      %53 = sbr.rel (0) target = $region21
    $region20: #{tpu_custom_call.1} parent=1 // pred_region
      _
    $region21: #{tpu_custom_call.1} parent=1 // pred_fallthru
      _
    // Predicated region
    $region22: #{tpu_custom_call.1} parent=1 // pred_check
      _
    $region23: #{tpu_custom_call.1} parent=1 // pred_check_branch
      %55 = sbr.rel (0) target = $region25
    $region24: #{tpu_custom_call.1} parent=1 // pred_region
      %57 = vsyncadd [#allocation10], 0
      %s59 = sshll.u32 %s5, 4
      %s60 = int_to_ptr.hbm [resolvable:$true] %s59
      %s61 = sshll.u32 [#allocation9], 4
      %s62 = int_to_ptr.vmem [resolvable:$true] %s61
      %64 = dma.hbm_to_vmem [thread:$0]  %s60, 128, %s62, [#allocation10]
    $region25: #{tpu_custom_call.1} parent=1 // pred_fallthru
      _
    // Predicated region
    $region26: #{tpu_custom_call.1} parent=1 // pred_check
      _
    $region27: #{tpu_custom_call.1} parent=1 // pred_check_branch
      %66 = sbr.rel (0) target = $region29
    $region28: #{tpu_custom_call.1} parent=1 // pred_region
      %68 = vsyncadd [#allocation10], 0
      %s70 = sshll.u32 %s6, 4
      %s71 = int_to_ptr.hbm [resolvable:$true] %s70
      %s72 = sshll.u32 [#allocation11], 4
      %s73 = int_to_ptr.vmem [resolvable:$true] %s72
      %75 = dma.hbm_to_vmem [thread:$0]  %s71, 128, %s73, [#allocation10]
    $region29: #{tpu_custom_call.1} parent=1 // pred_fallthru
      _
    // Predicated region
    $region30: #{tpu_custom_call.1} parent=1 // pred_check
      _
    $region31: #{tpu_custom_call.1} parent=1 // pred_check_branch
      %77 = sbr.rel (0) target = $region33
    $region32: #{tpu_custom_call.1} parent=1 // pred_region
      %79 = dma.done [#allocation4], 64
    $region33: #{tpu_custom_call.1} parent=1 // pred_fallthru
      _
    // Predicated region
    $region34: #{tpu_custom_call.1} parent=1 // pred_check
      _
    $region35: #{tpu_custom_call.1} parent=1 // pred_check_branch
      %81 = sbr.rel (0) target = $region37
    $region36: #{tpu_custom_call.1} parent=1 // pred_region
      %83 = dma.done [#allocation7], 64
    $region37: #{tpu_custom_call.1} parent=1 // pred_fallthru
      _
    // Predicated region
    $region38: #{tpu_custom_call.1} parent=1 // pred_check
      _
    $region39: #{tpu_custom_call.1} parent=1 // pred_check_branch
      %85 = sbr.rel (0) target = $region41
    $region40: #{tpu_custom_call.1} parent=1 // pred_region
      %87 = dma.done [#allocation7], 64
    $region41: #{tpu_custom_call.1} parent=1 // pred_fallthru
      _
    // Predicated region
    $region42: #{tpu_custom_call.1} parent=1 // pred_check
      _
    $region43: #{tpu_custom_call.1} parent=1 // pred_check_branch
      %89 = sbr.rel (0) target = $region45
    $region44: #{tpu_custom_call.1} parent=1 // pred_region
      %91 = dma.done [#allocation10], 128
    $region45: #{tpu_custom_call.1} parent=1 // pred_fallthru
      _
    // Predicated region
    $region46: #{tpu_custom_call.1} parent=1 // pred_check
      _
    $region47: #{tpu_custom_call.1} parent=1 // pred_check_branch
      %93 = sbr.rel (0) target = $region49
    $region48: #{tpu_custom_call.1} parent=1 // pred_region
      %95 = dma.done [#allocation10], 128
    $region49: #{tpu_custom_call.1} parent=1 // pred_fallthru
      _
    %s96 = sld [smem:[#allocation2]]
    %v97 = vld [vmem:[#allocation3] sm:$0x7]
    %v98 = vld [vmem:[#allocation6] sm:$0x7]
    %v99 = vld [vmem:[#allocation8] sm:$0x7]
    %v100 = vld [vmem:[%s4] sm:$0x1]
    %v101 = vsub.f32 %v97, %v99
    %v102 = vsub.f32 %v98, %v99
    %v103 = vmul.f32 %v101, %v101
    %vm104 = vcmask 59392
    %v105 = vsel %vm104, %v103, 0.0
    %v106 = vrot.slane %v105, 4
    %v107 = vadd.f32 %v105, %v106
    %v108 = vrot.slane %v107, 2
    %v109 = vadd.f32 %v107, %v108
    %v110 = vrot.slane %v109, 1
    %v111 = vadd.f32 %v109, %v110
    %v112 = vmul.f32 %v102, %v102
    %v113 = vsel %vm104, %v112, 0.0
    %v114 = vrot.slane %v113, 4
    %v115 = vadd.f32 %v113, %v114
    %v116 = vrot.slane %v115, 2
    %v117 = vadd.f32 %v115, %v116
    %v118 = vrot.slane %v117, 1
    %v119 = vadd.f32 %v117, %v118
    %vm120 = vcmask 57344
    %v121 = vsel %vm120, %v111, 0.0
    %122 = vadd.xlane.f32.xlu0 %v121
    %v123 = vpop.xlane.xlu0 %122
    %v124 = vrot.slane %v123, 4
    %v125 = vadd.f32 %v123, %v124
    %v126 = vrot.slane %v125, 2
    %v127 = vadd.f32 %v125, %v126
    %v128 = vrot.slane %v127, 1
    %v129 = vadd.f32 %v127, %v128
    %s130 = vtos %v129
    %s131 = smul.f32 %s130, 0.020833334
    %v132 = vmul.f32 %v100, 2.0
    %v133 = vmul.f32 %v132, %v100
    %v134 = vrcp.pop %v133
    %v135 = vmul.f32 %v133, %v134
    %v136 = vsub.f32 1.0, %v135
    %v137 = vmul.f32 %v134, %v136
    %v138 = vadd.f32 %v134, %v137
    %vm139 = vweird.f32 %v133
    %vm140 = vweird.f32 %v134
    %vm141 = vmor %vm139, %vm140
    %v142 = vsel %vm141, %v134, %v138
    %v143 = vand.u32 2147483647, %v133
    %vm144 = vcmp.eq.f32.partialorder %v143, 8.507059e+37
    %v145 = vand.u32 %v133, 2147483648
    %v146 = vor.u32 1.1754944e-38, %v145
    %v147 = vsel %vm144, %v146, %v142
    %v148 = vmul.f32 %v119, %v147
    %v149 = vsel %vm120, %v148, 0.0
    %150 = vadd.xlane.f32.xlu0 %v149
    %v151 = vpop.xlane.xlu0 %150
    %v152 = vrot.slane %v151, 4
    %v153 = vadd.f32 %v151, %v152
    %v154 = vrot.slane %v153, 2
    %v155 = vadd.f32 %v153, %v154
    %v156 = vrot.slane %v155, 1
    %v157 = vadd.f32 %v155, %v156
    %s158 = vtos %v157
    %s159 = smul.f32 %s158, 0.041666668
    %v160 = vlog2.pop %v100
    %v161 = vmul.f32 %v160, 0.6931472
    %v162 = vsel %vm120, %v161, 0.0
    %163 = vadd.xlane.f32.xlu0 %v162
    %v164 = vpop.xlane.xlu0 %163
    %v165 = vrot.slane %v164, 4
    %v166 = vadd.f32 %v164, %v165
    %v167 = vrot.slane %v166, 2
    %v168 = vadd.f32 %v166, %v167
    %v169 = vrot.slane %v168, 1
    %v170 = vadd.f32 %v168, %v169
    %s171 = vtos %v170
    %s172 = smul.f32 %s171, 0.125
    %v173 = vld [vmem:[#allocation9] sm:$0xff]
    %v174 = vrot.slane %v173, 4
    %v175 = vadd.f32 %v173, %v174
    %v176 = vrot.slane %v175, 2
    %v177 = vadd.f32 %v175, %v176
    %v178 = vrot.slane %v177, 1
    %v179 = vadd.f32 %v177, %v178
    %v180 = vmul.f32 %v179, 0.0078125
    %v181 = vld [vmem:[#allocation11] sm:$0xff]
    %v182 = vrot.slane %v181, 4
    %v183 = vadd.f32 %v181, %v182
    %v184 = vrot.slane %v183, 2
    %v185 = vadd.f32 %v183, %v184
    %v186 = vrot.slane %v185, 1
    %v187 = vadd.f32 %v185, %v186
    %v188 = vmul.f32 %v187, 0.0078125
    %v189 = vadd.f32 %v180, %v188
    %vm190 = vcmask 1040384
    %v191 = vsel %vm190, %v189, 0.0
    %192 = vadd.xlane.f32.xlu0 %v191
    %v193 = vpop.xlane.xlu0 %192
    %v194 = vrot.slane %v193, 4
    %v195 = vadd.f32 %v193, %v194
    %v196 = vrot.slane %v195, 2
    %v197 = vadd.f32 %v195, %v196
    %v198 = vrot.slane %v197, 1
    %v199 = vadd.f32 %v197, %v198
    %s200 = vtos %v199
    %s201 = smul.f32 %s96, %s200
    %v202 = vlaneseq
    %v203 = vshrl.u32 %v202, 7
    %vm204 = vcmp.eq.s32.totalorder %v203, 0
    %vm205 = vcmp.eq.s32.totalorder %v203, 1
    %vm206 = vcmp.eq.s32.totalorder %v203, 2
    %vm207 = vcmp.eq.s32.totalorder %v203, 3
    %v208 = vstv %s201
    %v209 = vsel %vm207, %v208, 0.0
    %v210 = vstv %s172
    %v211 = vsel %vm206, %v210, %v209
    %v212 = vstv %s159
    %v213 = vsel %vm205, %v212, %v211
    %v214 = vstv %s131
    %v215 = vsel %vm204, %v214, %v213
    %216 = vst [vmem:[#allocation12] sm:$0xff] %v215
    // Predicated region
    $region50: #{tpu_custom_call.1} parent=1 // pred_check
      _
    $region51: #{tpu_custom_call.1} parent=1 // pred_check_branch
      %218 = sbr.rel (0) target = $region53
    $region52: #{tpu_custom_call.1} parent=1 // pred_region
      %220 = vsyncadd [#allocation5], 0
      %s222 = sshll.u32 [#allocation12], 4
      %s223 = int_to_ptr.vmem [resolvable:$true] %s222
      %s224 = sshll.u32 %s7, 4
      %s225 = int_to_ptr.hbm [resolvable:$true] %s224
      %227 = dma.vmem_to_hbm [thread:$0]  %s223, 128, %s225, [#allocation5]
    $region53: #{tpu_custom_call.1} parent=1 // pred_fallthru
      _
    // Predicated region
    $region54: #{tpu_custom_call.1} parent=1 // pred_check
      _
    $region55: #{tpu_custom_call.1} parent=1 // pred_check_branch
      %229 = sbr.rel (0) target = $region57
    $region56: #{tpu_custom_call.1} parent=1 // pred_region
      %231 = dma.done [#allocation5], 128
    $region57: #{tpu_custom_call.1} parent=1 // pred_fallthru
      _
    %232 = vsyncpa [#allocation4], 1
    %233 = vsyncpa [#allocation7], 1
    %234 = vsyncpa [#allocation10], 1
    %235 = vsyncpa [#allocation5], 1

</llo_original>
